<compile_context>
chip_gen: v7x
topology: tpu7x:2x2x1
jax: 0.10.0
libtpu: 0.0.40
codegen_flags: <defaults>
</compile_context>

<pallas_src>
import functools

import jax
import jax.numpy as jnp
from jax.experimental import pallas as pl
from jax.experimental.pallas import tpu as pltpu

FEAT_PAD = 128        # lane-dense hidden width (multiple of 128)
IN_PAD = 8            # padded input feature dim (2 -> 8; one sublane tile)
OUT_PAD = 8           # padded output feature dim (1 -> 8)
MAX_BATCH_TILE = 512  # rows per grid step for large batches (85% of roofline)


def _round_up(n, m):
    return -(-n // m) * m


def _choose_batch_tile(batch):
    bp = _round_up(batch, 8)
    if bp <= 16:
        return bp
    # Prefer >=2 grid steps (v7x has 2 TensorCores) while capping the tile.
    half = _round_up(bp // 2, 8)
    return min(MAX_BATCH_TILE, half)


def _mlp_kernel(x_ref, w0_ref, b0_ref, wm_ref, bm_ref, wl_ref, bl_ref, o_ref,
                *, n_mid):
    # x_ref:(TB,8) f32   w0:(8,128)  b0:(1,128)
    # wm:(nm,128,128)    bm:(nm,1,128)
    # wl:(128,8)         bl:(1,8)    o_ref:(TB,8) f32
    # Weights may be bf16 (MXU operand dtype); bias/tanh/accumulation stay f32.
    cdt = w0_ref.dtype
    h = jnp.tanh(  # padded hidden lanes stay exactly 0 (zero weights/bias)
        jnp.dot(x_ref[...].astype(cdt), w0_ref[...],
                preferred_element_type=jnp.float32) + b0_ref[...])
    # Static unroll over the hidden layers; activation never leaves VMEM/vregs.
    for i in range(n_mid):
        y = jnp.dot(h.astype(cdt), wm_ref[i],
                    preferred_element_type=jnp.float32) + bm_ref[i]
        h = jnp.tanh(y)  # EUP slot
    y = jnp.dot(h.astype(cdt), wl_ref[...],
                preferred_element_type=jnp.float32) + bl_ref[...]
    o_ref[...] = y.astype(o_ref.dtype)


def _mlp_pallas(x_pad, w0, b0, wm, bm, wl, bl, *, batch_tile, n_mid):
    bp = x_pad.shape[0]
    nm = wm.shape[0]
    kernel = functools.partial(_mlp_kernel, n_mid=n_mid)
    return pl.pallas_call(
        kernel,
        out_shape=jax.ShapeDtypeStruct((bp, OUT_PAD), jnp.float32),
        grid=(bp // batch_tile,),
        in_specs=[
            pl.BlockSpec((batch_tile, IN_PAD), lambda i: (i, 0)),
            # Constant index_maps -> weights/biases stay resident in VMEM
            # across the whole batch sweep (~L * 64 KiB).
            pl.BlockSpec((IN_PAD, FEAT_PAD), lambda i: (0, 0)),
            pl.BlockSpec((1, FEAT_PAD), lambda i: (0, 0)),
            pl.BlockSpec((nm, FEAT_PAD, FEAT_PAD), lambda i: (0, 0, 0)),
            pl.BlockSpec((nm, 1, FEAT_PAD), lambda i: (0, 0, 0)),
            pl.BlockSpec((FEAT_PAD, OUT_PAD), lambda i: (0, 0)),
            pl.BlockSpec((1, OUT_PAD), lambda i: (0, 0)),
        ],
        out_specs=pl.BlockSpec((batch_tile, OUT_PAD), lambda i: (i, 0)),
        compiler_params=pltpu.CompilerParams(
            dimension_semantics=("parallel",)),
    )(x_pad, w0, b0, wm, bm, wl, bl)


@functools.partial(jax.jit, static_argnames=("n_mid", "out_dim"))
def _net_forward_impl(x, w0, b0, wm, bm, wl, bl, *, n_mid, out_dim):
    batch = x.shape[0]
    batch_tile = _choose_batch_tile(batch)
    bp = _round_up(batch, batch_tile)
    # Only the tiny (batch,2)->(bp,8) pad happens per call; weights are
    # already padded/stacked once in prepare_params.
    x_pad = jnp.pad(x, ((0, bp - batch), (0, IN_PAD - x.shape[1])))
    out_pad = _mlp_pallas(x_pad, w0, b0, wm, bm, wl, bl,
                          batch_tile=batch_tile, n_mid=n_mid)
    return out_pad[:batch, :out_dim]


def prepare_params(params, matmul_dtype=jnp.float32):
    """One-time padding/stacking of Net weights (hoisted out of the hot path).

    Zero padding is semantics-preserving: zero weight rows/cols and zero bias
    keep padded lanes exactly 0 through tanh.  `matmul_dtype=jnp.bfloat16`
    stores weights as bf16 MXU operands (v6e/v7x win)."""
    (w0, b0) = params[0]
    mids = params[1:-1]
    (wl, bl) = params[-1]
    width = w0.shape[1]
    w0_p = jnp.pad(w0, ((0, IN_PAD - w0.shape[0]),
                        (0, FEAT_PAD - width))).astype(matmul_dtype)
    b0_p = jnp.pad(b0, (0, FEAT_PAD - width)).reshape(1, FEAT_PAD)
    if mids:
        wm = jnp.stack([jnp.pad(w, ((0, FEAT_PAD - w.shape[0]),
                                    (0, FEAT_PAD - w.shape[1])))
                        for w, _ in mids]).astype(matmul_dtype)
        bm = jnp.stack([jnp.pad(b, (0, FEAT_PAD - b.shape[0])).reshape(1, FEAT_PAD)
                        for _, b in mids])
    else:  # num_layers == 1: dummy (never read; kernel loop has 0 iterations)
        wm = jnp.zeros((1, FEAT_PAD, FEAT_PAD), matmul_dtype)
        bm = jnp.zeros((1, 1, FEAT_PAD), jnp.float32)
    wl_p = jnp.pad(wl, ((0, FEAT_PAD - wl.shape[0]),
                        (0, OUT_PAD - wl.shape[1]))).astype(matmul_dtype)
    bl_p = jnp.pad(bl, (0, OUT_PAD - bl.shape[0])).reshape(1, OUT_PAD)
    return dict(w0=w0_p, b0=b0_p, wm=wm, bm=bm, wl=wl_p, bl=bl_p,
                n_mid=len(mids), out_dim=int(wl.shape[1]))


def net_forward(prepared, x):
    """Forward pass of Net: tanh(Linear) x num_layers, then final Linear."""
    return _net_forward_impl(
        x, prepared["w0"], prepared["b0"], prepared["wm"], prepared["bm"],
        prepared["wl"], prepared["bl"],
        n_mid=prepared["n_mid"], out_dim=prepared["out_dim"])


def init_params(key, num_layers, width):
    """Deterministic init mirroring nn.Linear shapes.

    PyTorch stores weight as (out, in); we keep (in, out) for x @ W."""
    params = []
    dims = [(2, width)] + [(width, width)] * (num_layers - 1) + [(width, 1)]
    for in_d, out_d in dims:
        key, kw, kb = jax.random.split(key, 3)
        bound = 1.0 / jnp.sqrt(in_d)
        w = jax.random.uniform(kw, (in_d, out_d), jnp.float32, -bound, bound)
        b = jax.random.uniform(kb, (out_d,), jnp.float32, -bound, bound)
        params.append((w, b))
    return params


def net_forward_ref(params, x):
    h = x
    for w, b in params[:-1]:
        h = jnp.tanh(h @ w + b)
    w, b = params[-1]
    return h @ w + b


if __name__ == "__main__":
    num_layers = 3
    width = 32
    batch = 8

    key = jax.random.PRNGKey(0)
    key, kx = jax.random.split(key)
    x = jax.random.normal(kx, (batch, 2), jnp.float32)
    params = init_params(key, num_layers, width)

    prepared = prepare_params(params)  # f32 MXU operands (exact vs reference)
    out = jax.block_until_ready(net_forward(prepared, x))
    ref = net_forward_ref(params, x)
    assert out.shape == (batch, 1)
    assert jnp.allclose(out, ref, atol=1e-5, rtol=1e-5)

    # Larger batch exercises the multi-step parallel batch grid (2 x 128-row tiles).
    key, kx2 = jax.random.split(key)
    x2 = jax.random.normal(kx2, (256, 2), jnp.float32)
    out2 = jax.block_until_ready(net_forward(prepared, x2))
    ref2 = net_forward_ref(params, x2)
    assert jnp.allclose(out2, ref2, atol=1e-5, rtol=1e-5)

    # bf16 MXU-operand variant (v6e/v7x perf option); elementwise stays f32.
    prepared_bf16 = prepare_params(params, jnp.bfloat16)
    out3 = jax.block_until_ready(net_forward(prepared_bf16, x2))
    assert jnp.allclose(out3, ref2, atol=5e-2, rtol=0.0)

    print("KERNEL_OK")
</pallas_src>

<mosaic_0001>
module attributes {stable_mosaic.version = 11 : i64} {
  func.func @_mlp_kernel(%arg0: i32, %arg1: memref<8x8xf32, #tpu.memory_space<vmem>>, %arg2: memref<8x128xf32, #tpu.memory_space<vmem>>, %arg3: memref<1x128xf32, #tpu.memory_space<vmem>>, %arg4: memref<2x128x128xf32, #tpu.memory_space<vmem>>, %arg5: memref<2x1x128xf32, #tpu.memory_space<vmem>>, %arg6: memref<128x8xf32, #tpu.memory_space<vmem>>, %arg7: memref<1x8xf32, #tpu.memory_space<vmem>>, %arg8: memref<8x8xf32, #tpu.memory_space<vmem>>) attributes {dimension_semantics = [#tpu.dimension_semantics<parallel>], iteration_bounds = array<i64: 1>, scalar_prefetch = 0 : i64, scratch_operands = 0 : i64, tpu.core_type = #tpu.core_type<tc>, window_params = [{transform_indices = @transform_0, window_bounds = array<i64: 8, 8>}, {pipeline_mode = #tpu.pipeline_mode<synchronous>, transform_indices = @transform_1, window_bounds = array<i64: 8, 128>}, {pipeline_mode = #tpu.pipeline_mode<synchronous>, transform_indices = @transform_2, window_bounds = array<i64: 1, 128>}, {pipeline_mode = #tpu.pipeline_mode<synchronous>, transform_indices = @transform_3, window_bounds = array<i64: 2, 128, 128>}, {pipeline_mode = #tpu.pipeline_mode<synchronous>, transform_indices = @transform_4, window_bounds = array<i64: 2, 1, 128>}, {pipeline_mode = #tpu.pipeline_mode<synchronous>, transform_indices = @transform_5, window_bounds = array<i64: 128, 8>}, {pipeline_mode = #tpu.pipeline_mode<synchronous>, transform_indices = @transform_6, window_bounds = array<i64: 1, 8>}, {transform_indices = @transform_7, window_bounds = array<i64: 8, 8>}]} {
    %c0 = arith.constant 0 : index
    %c0_0 = arith.constant 0 : index
    %0 = vector.load %arg1[%c0, %c0_0] : memref<8x8xf32, #tpu.memory_space<vmem>>, vector<8x8xf32>
    %c0_1 = arith.constant 0 : index
    %c0_2 = arith.constant 0 : index
    %1 = vector.load %arg2[%c0_1, %c0_2] : memref<8x128xf32, #tpu.memory_space<vmem>>, vector<8x128xf32>
    %cst = arith.constant dense<0.000000e+00> : vector<8x128xf32>
    %2 = tpu.matmul %0, %1, %cst {dimension_numbers = #tpu.dot_dimension_numbers<[1], [0], [0], [1], [0, 0, 1, 1], [], []>} : vector<8x8xf32>, vector<8x128xf32>, vector<8x128xf32> -> vector<8x128xf32>
    %c0_3 = arith.constant 0 : index
    %c0_4 = arith.constant 0 : index
    %3 = vector.load %arg3[%c0_3, %c0_4] : memref<1x128xf32, #tpu.memory_space<vmem>>, vector<1x128xf32>
    %4 = vector.broadcast %3 : vector<1x128xf32> to vector<8x128xf32>
    %5 = arith.addf %2, %4 : vector<8x128xf32>
    %6 = math.tanh %5 : vector<8x128xf32>
    %c0_5 = arith.constant 0 : index
    %c0_6 = arith.constant 0 : index
    %c0_7 = arith.constant 0 : index
    %7 = vector.load %arg4[%c0_5, %c0_6, %c0_7] : memref<2x128x128xf32, #tpu.memory_space<vmem>>, vector<1x128x128xf32>
    %8 = vector.shape_cast %7 : vector<1x128x128xf32> to vector<128x128xf32>
    %cst_8 = arith.constant dense<0.000000e+00> : vector<8x128xf32>
    %9 = tpu.matmul %6, %8, %cst_8 {dimension_numbers = #tpu.dot_dimension_numbers<[1], [0], [0], [1], [0, 0, 1, 1], [], []>} : vector<8x128xf32>, vector<128x128xf32>, vector<8x128xf32> -> vector<8x128xf32>
    %c0_9 = arith.constant 0 : index
    %c0_10 = arith.constant 0 : index
    %c0_11 = arith.constant 0 : index
    %10 = vector.load %arg5[%c0_9, %c0_10, %c0_11] : memref<2x1x128xf32, #tpu.memory_space<vmem>>, vector<1x1x128xf32>
    %11 = vector.shape_cast %10 : vector<1x1x128xf32> to vector<1x128xf32>
    %12 = vector.broadcast %11 : vector<1x128xf32> to vector<8x128xf32>
    %13 = arith.addf %9, %12 : vector<8x128xf32>
    %14 = math.tanh %13 : vector<8x128xf32>
    %c1 = arith.constant 1 : index
    %c0_12 = arith.constant 0 : index
    %c0_13 = arith.constant 0 : index
    %15 = vector.load %arg4[%c1, %c0_12, %c0_13] : memref<2x128x128xf32, #tpu.memory_space<vmem>>, vector<1x128x128xf32>
    %16 = vector.shape_cast %15 : vector<1x128x128xf32> to vector<128x128xf32>
    %cst_14 = arith.constant dense<0.000000e+00> : vector<8x128xf32>
    %17 = tpu.matmul %14, %16, %cst_14 {dimension_numbers = #tpu.dot_dimension_numbers<[1], [0], [0], [1], [0, 0, 1, 1], [], []>} : vector<8x128xf32>, vector<128x128xf32>, vector<8x128xf32> -> vector<8x128xf32>
    %c1_15 = arith.constant 1 : index
    %c0_16 = arith.constant 0 : index
    %c0_17 = arith.constant 0 : index
    %18 = vector.load %arg5[%c1_15, %c0_16, %c0_17] : memref<2x1x128xf32, #tpu.memory_space<vmem>>, vector<1x1x128xf32>
    %19 = vector.shape_cast %18 : vector<1x1x128xf32> to vector<1x128xf32>
    %20 = vector.broadcast %19 : vector<1x128xf32> to vector<8x128xf32>
    %21 = arith.addf %17, %20 : vector<8x128xf32>
    %22 = math.tanh %21 : vector<8x128xf32>
    %c0_18 = arith.constant 0 : index
    %c0_19 = arith.constant 0 : index
    %23 = vector.load %arg6[%c0_18, %c0_19] : memref<128x8xf32, #tpu.memory_space<vmem>>, vector<128x8xf32>
    %cst_20 = arith.constant dense<0.000000e+00> : vector<8x8xf32>
    %24 = tpu.matmul %22, %23, %cst_20 {dimension_numbers = #tpu.dot_dimension_numbers<[1], [0], [0], [1], [0, 0, 1, 1], [], []>} : vector<8x128xf32>, vector<128x8xf32>, vector<8x8xf32> -> vector<8x8xf32>
    %c0_21 = arith.constant 0 : index
    %c0_22 = arith.constant 0 : index
    %25 = vector.load %arg7[%c0_21, %c0_22] : memref<1x8xf32, #tpu.memory_space<vmem>>, vector<1x8xf32>
    %26 = vector.broadcast %25 : vector<1x8xf32> to vector<8x8xf32>
    %27 = arith.addf %24, %26 : vector<8x8xf32>
    %c0_23 = arith.constant 0 : index
    %c0_24 = arith.constant 0 : index
    %28 = vector.load %arg8[%c0_23, %c0_24] : memref<8x8xf32, #tpu.memory_space<vmem>>, vector<8x8xf32>
    tpu.vector_store %arg8[%c0_23, %c0_24], %27 {strides = array<i32>} : memref<8x8xf32, #tpu.memory_space<vmem>>, vector<8x8xf32>,
    return
  }
  func.func @transform_0(%arg0: i32) -> (i32, i32) {
    %c0_i32 = arith.constant 0 : i32
    %c0_i32_0 = arith.constant 0 : i32
    return %arg0, %c0_i32 : i32, i32
  }
  func.func @transform_1(%arg0: i32) -> (i32, i32) {
    %c0_i32 = arith.constant 0 : i32
    %c0_i32_0 = arith.constant 0 : i32
    %c0_i32_1 = arith.constant 0 : i32
    return %c0_i32, %c0_i32_0 : i32, i32
  }
  func.func @transform_2(%arg0: i32) -> (i32, i32) {
    %c0_i32 = arith.constant 0 : i32
    %c0_i32_0 = arith.constant 0 : i32
    %c0_i32_1 = arith.constant 0 : i32
    return %c0_i32, %c0_i32_0 : i32, i32
  }
  func.func @transform_3(%arg0: i32) -> (i32, i32, i32) {
    %c0_i32 = arith.constant 0 : i32
    %c0_i32_0 = arith.constant 0 : i32
    %c0_i32_1 = arith.constant 0 : i32
    %c0_i32_2 = arith.constant 0 : i32
    return %c0_i32, %c0_i32_0, %c0_i32_1 : i32, i32, i32
  }
  func.func @transform_4(%arg0: i32) -> (i32, i32, i32) {
    %c0_i32 = arith.constant 0 : i32
    %c0_i32_0 = arith.constant 0 : i32
    %c0_i32_1 = arith.constant 0 : i32
    %c0_i32_2 = arith.constant 0 : i32
    return %c0_i32, %c0_i32_0, %c0_i32_1 : i32, i32, i32
  }
  func.func @transform_5(%arg0: i32) -> (i32, i32) {
    %c0_i32 = arith.constant 0 : i32
    %c0_i32_0 = arith.constant 0 : i32
    %c0_i32_1 = arith.constant 0 : i32
    return %c0_i32, %c0_i32_0 : i32, i32
  }
  func.func @transform_6(%arg0: i32) -> (i32, i32) {
    %c0_i32 = arith.constant 0 : i32
    %c0_i32_0 = arith.constant 0 : i32
    %c0_i32_1 = arith.constant 0 : i32
    return %c0_i32, %c0_i32_0 : i32, i32
  }
  func.func @transform_7(%arg0: i32) -> (i32, i32) {
    %c0_i32 = arith.constant 0 : i32
    %c0_i32_0 = arith.constant 0 : i32
    return %arg0, %c0_i32 : i32, i32
  }
}

</mosaic_0001>

<llo_original>
// kernel: _net_forward_impl.1
$region0: #{_net_forward_impl.1}
  #allocation0 [shape = 'u32[]', space=smem, size = 0x4, offset = 0x4, fixed_abs, tag = 'smem constant byte address 0x4 - core index']
  #allocation1 [shape = 'u32[144,128]{1,0:T(1,128)}', space=vmem, size = 0x12000, scoped, tag = 'internal scratch']
  %s0 = inlined_call_operand.vmem [shape: f32[8,8], index: 0, kind: input, shape index: {}]
  %s1 = inlined_call_operand.vmem [shape: f32[8,128], index: 1, kind: input, shape index: {}]
  %s2 = inlined_call_operand.vmem [shape: f32[1,128], index: 2, kind: input, shape index: {}]
  %s3 = inlined_call_operand.hbm [shape: f32[2,128,128], index: 3, kind: input, shape index: {}]
  %s4 = inlined_call_operand.vmem [shape: f32[2,1,128], index: 4, kind: input, shape index: {}]
  %s5 = inlined_call_operand.vmem [shape: f32[128,8], index: 5, kind: input, shape index: {}]
  %s6 = inlined_call_operand.vmem [shape: f32[1,8], index: 6, kind: input, shape index: {}]
  %s7 = inlined_call_operand.vmem [shape: f32[8,8], index: 7, kind: output, shape index: {}]
  %s8 = sld [smem:[#allocation0]]
  $region42: #{_net_forward_impl.1} parent=0
    _
  %s10 = ssub.s32 1, %s8
  %s11 = scalar_select 0, %s10, %s8
  $region1: #{_net_forward_impl.1} parent=0
    #allocation2 [shape = 'u8[131072]{0}', space=vmem, size = 0x20000, scoped, tag = 'input window, operand 3, single buffered']
    #allocation3 [shape = 's32[1]{0}', space=sflag, size = 0x4, scoped, tag = 'scoped memory for _net_forward_impl.1']
    %12 = vsyncpa [#allocation3], 0
    // Predicated region
    $region2: #{_net_forward_impl.1} parent=1 // pred_check
      _
    $region3: #{_net_forward_impl.1} parent=1 // pred_check_branch
      %14 = sbr.rel (0) target = $region5
    $region4: #{_net_forward_impl.1} parent=1 // pred_region
      _
    $region5: #{_net_forward_impl.1} parent=1 // pred_fallthru
      _
    // Predicated region
    $region6: #{_net_forward_impl.1} parent=1 // pred_check
      _
    $region7: #{_net_forward_impl.1} parent=1 // pred_check_branch
      %16 = sbr.rel (0) target = $region9
    $region8: #{_net_forward_impl.1} parent=1 // pred_region
      _
    $region9: #{_net_forward_impl.1} parent=1 // pred_fallthru
      _
    // Predicated region
    $region10: #{_net_forward_impl.1} parent=1 // pred_check
      _
    $region11: #{_net_forward_impl.1} parent=1 // pred_check_branch
      %18 = sbr.rel (0) target = $region13
    $region12: #{_net_forward_impl.1} parent=1 // pred_region
      _
    $region13: #{_net_forward_impl.1} parent=1 // pred_fallthru
      _
    // Predicated region
    $region14: #{_net_forward_impl.1} parent=1 // pred_check
      _
    $region15: #{_net_forward_impl.1} parent=1 // pred_check_branch
      %20 = sbr.rel (0) target = $region17
    $region16: #{_net_forward_impl.1} parent=1 // pred_region
      %s22 = ssub.s32 4096, 4096
      %23 = vsyncadd [#allocation3], %s22
      %s24 = sshll.u32 [#allocation2], 4
      %s25 = int_to_ptr.vmem [resolvable:$true] %s24
      %30 = dma.hbm_to_vmem [thread:$0]  %s3, 4096, %s25, [#allocation3], 128, 128, 8
    $region17: #{_net_forward_impl.1} parent=1 // pred_fallthru
      _
    // Predicated region
    $region18: #{_net_forward_impl.1} parent=1 // pred_check
      _
    $region19: #{_net_forward_impl.1} parent=1 // pred_check_branch
      %32 = sbr.rel (0) target = $region21
    $region20: #{_net_forward_impl.1} parent=1 // pred_region
      _
    $region21: #{_net_forward_impl.1} parent=1 // pred_fallthru
      _
    // Predicated region
    $region22: #{_net_forward_impl.1} parent=1 // pred_check
      _
    $region23: #{_net_forward_impl.1} parent=1 // pred_check_branch
      %34 = sbr.rel (0) target = $region25
    $region24: #{_net_forward_impl.1} parent=1 // pred_region
      _
    $region25: #{_net_forward_impl.1} parent=1 // pred_fallthru
      _
    // Predicated region
    $region26: #{_net_forward_impl.1} parent=1 // pred_check
      _
    $region27: #{_net_forward_impl.1} parent=1 // pred_check_branch
      %36 = sbr.rel (0) target = $region29
    $region28: #{_net_forward_impl.1} parent=1 // pred_region
      _
    $region29: #{_net_forward_impl.1} parent=1 // pred_fallthru
      _
    // Predicated region
    $region30: #{_net_forward_impl.1} parent=1 // pred_check
      _
    $region31: #{_net_forward_impl.1} parent=1 // pred_check_branch
      %38 = sbr.rel (0) target = $region33
    $region32: #{_net_forward_impl.1} parent=1 // pred_region
      %39 = dma.done [#allocation3], 4096
    $region33: #{_net_forward_impl.1} parent=1 // pred_fallthru
      _
    %v40 = vld [vmem:[%s0] sm:$0xff]
    %v41 = vld [vmem:[%s1] sm:$0xff]
    %v42 = vld [vmem:[%s2] sm:$0x1]
    %v44 = vlaneseq
    %v45 = vshrl.u32 %v44, 7
    %v46 = vsub.s32 0, %v45
    %v47 = vrot.slane %v42, %v46
    %vm49 = vcmask 64512
    %v51 = vsel %vm49, %v40, 0
    %53 = vmatprep.subr.mxu0 0.0
    %54 = vmatpush1.msra.mxu0 %v41
    %55 = vmatprep.subr.mxu0 0.0
    %56 = vmatpush1.msra.mxu0 0.0
    %57 = vmatprep.subr.mxu0 0.0
    %58 = vmatpush1.msra.mxu0 0.0
    %59 = vmatprep.subr.mxu0 0.0
    %60 = vmatpush1.msra.mxu0 0.0
    %61 = vmatprep.subr.mxu0 0.0
    %62 = vmatpush1.msra.mxu0 0.0
    %63 = vmatprep.subr.mxu0 0.0
    %64 = vmatpush1.msra.mxu0 0.0
    %65 = vmatprep.subr.mxu0 0.0
    %66 = vmatpush1.msra.mxu0 0.0
    %67 = vmatprep.subr.mxu0 0.0
    %68 = vmatpush1.msra.mxu0 0.0
    %69 = vmatprep.subr.mxu0 0.0
    %70 = vmatpush1.msra.mxu0 0.0
    %71 = vmatprep.subr.mxu0 0.0
    %72 = vmatpush1.msra.mxu0 0.0
    %73 = vmatprep.subr.mxu0 0.0
    %74 = vmatpush1.msra.mxu0 0.0
    %75 = vmatprep.subr.mxu0 0.0
    %76 = vmatpush1.msra.mxu0 0.0
    %77 = vmatprep.subr.mxu0 0.0
    %78 = vmatpush1.msra.mxu0 0.0
    %79 = vmatprep.subr.mxu0 0.0
    %80 = vmatpush1.msra.mxu0 0.0
    %81 = vmatprep.subr.mxu0 0.0
    %82 = vmatpush1.msra.mxu0 0.0
    %83 = vmatprep.subr.mxu0 0.0
    %84 = vmatpush1.msra.mxu0 0.0
    %85 = vmatprep.subr.mxu0 0.0
    %86 = vmatpush1.msra.mxu0 0.0
    %87 = vmatprep.subr.mxu0 0.0
    %88 = vmatpush1.msra.mxu0 0.0
    %89 = vmatprep.subr.mxu0 0.0
    %90 = vmatpush1.msra.mxu0 0.0
    %91 = vmatprep.subr.mxu0 0.0
    %92 = vmatpush1.msra.mxu0 0.0
    %93 = vmatprep.subr.mxu0 0.0
    %94 = vmatpush1.msra.mxu0 0.0
    %95 = vmatprep.subr.mxu0 0.0
    %96 = vmatpush1.msra.mxu0 0.0
    %97 = vmatprep.subr.mxu0 0.0
    %98 = vmatpush1.msra.mxu0 0.0
    %99 = vmatprep.subr.mxu0 0.0
    %100 = vmatpush1.msra.mxu0 0.0
    %101 = vmatprep.subr.mxu0 0.0
    %102 = vmatpush1.msra.mxu0 0.0
    %103 = vmatprep.subr.mxu0 0.0
    %104 = vmatpush1.msra.mxu0 0.0
    %105 = vmatprep.subr.mxu0 0.0
    %106 = vmatpush1.msra.mxu0 0.0
    %107 = vmatprep.subr.mxu0 0.0
    %108 = vmatpush1.msra.mxu0 0.0
    %109 = vmatprep.subr.mxu0 0.0
    %110 = vmatpush1.msra.mxu0 0.0
    %111 = vmatprep.subr.mxu0 0.0
    %112 = vmatpush1.msra.mxu0 0.0
    %113 = vmatprep.subr.mxu0 0.0
    %114 = vmatpush1.msra.mxu0 0.0
    %115 = vmatprep.subr.mxu0 0.0
    %116 = vmatpush1.msra.mxu0 0.0
    %117 = vmatprep.mubr.f32.mxu0 0.0
    %118 = vmatmul.mubr.f32.gmra.mrb[0].mxu0 %v51
    %v119 = vpop.f32.mrb[0].mxu0
    %v120 = vadd.f32 %v47, %v119
    %v121 = vpop.f32.mrb[0].mxu0
    %122 = vdwg.mxu0
    %v123 = vtanh.pop %v120
    %v124 = vld [vmem:[#allocation2] sm:$0xff]
    %v125 = vld [vmem:[#allocation2 + $0x8] sm:$0xff]
    %v126 = vld [vmem:[#allocation2 + $0x10] sm:$0xff]
    %v127 = vld [vmem:[#allocation2 + $0x18] sm:$0xff]
    %v128 = vld [vmem:[#allocation2 + $0x20] sm:$0xff]
    %v129 = vld [vmem:[#allocation2 + $0x28] sm:$0xff]
    %v130 = vld [vmem:[#allocation2 + $0x30] sm:$0xff]
    %v131 = vld [vmem:[#allocation2 + $0x38] sm:$0xff]
    %v132 = vld [vmem:[#allocation2 + $0x40] sm:$0xff]
    %v133 = vld [vmem:[#allocation2 + $0x48] sm:$0xff]
    %v134 = vld [vmem:[#allocation2 + $0x50] sm:$0xff]
    %v135 = vld [vmem:[#allocation2 + $0x58] sm:$0xff]
    %v136 = vld [vmem:[#allocation2 + $0x60] sm:$0xff]
    %v137 = vld [vmem:[#allocation2 + $0x68] sm:$0xff]
    %v138 = vld [vmem:[#allocation2 + $0x70] sm:$0xff]
    %v139 = vld [vmem:[#allocation2 + $0x78] sm:$0xff]
    %v140 = vld [vmem:[%s4] sm:$0x1]
    %v142 = vlaneseq
    %v143 = vshrl.u32 %v142, 7
    %v144 = vsub.s32 0, %v143
    %v145 = vrot.slane %v140, %v144
    %147 = vmatprep.subr.mxu0 0.0
    %148 = vmatpush1.msra.mxu0 %v124
    %149 = vmatprep.subr.mxu0 0.0
    %150 = vmatpush1.msra.mxu0 %v125
    %151 = vmatprep.subr.mxu0 0.0
    %152 = vmatpush1.msra.mxu0 %v126
    %153 = vmatprep.subr.mxu0 0.0
    %154 = vmatpush1.msra.mxu0 %v127
    %155 = vmatprep.subr.mxu0 0.0
    %156 = vmatpush1.msra.mxu0 %v128
    %157 = vmatprep.subr.mxu0 0.0
    %158 = vmatpush1.msra.mxu0 %v129
    %159 = vmatprep.subr.mxu0 0.0
    %160 = vmatpush1.msra.mxu0 %v130
    %161 = vmatprep.subr.mxu0 0.0
    %162 = vmatpush1.msra.mxu0 %v131
    %163 = vmatprep.subr.mxu0 0.0
    %164 = vmatpush1.msra.mxu0 %v132
    %165 = vmatprep.subr.mxu0 0.0
    %166 = vmatpush1.msra.mxu0 %v133
    %167 = vmatprep.subr.mxu0 0.0
    %168 = vmatpush1.msra.mxu0 %v134
    %169 = vmatprep.subr.mxu0 0.0
    %170 = vmatpush1.msra.mxu0 %v135
    %171 = vmatprep.subr.mxu0 0.0
    %172 = vmatpush1.msra.mxu0 %v136
    %173 = vmatprep.subr.mxu0 0.0
    %174 = vmatpush1.msra.mxu0 %v137
    %175 = vmatprep.subr.mxu0 0.0
    %176 = vmatpush1.msra.mxu0 %v138
    %177 = vmatprep.subr.mxu0 0.0
    %178 = vmatpush1.msra.mxu0 %v139
    %179 = vmatprep.subr.mxu0 0.0
    %180 = vmatpush1.msra.mxu0 0.0
    %181 = vmatprep.subr.mxu0 0.0
    %182 = vmatpush1.msra.mxu0 0.0
    %183 = vmatprep.subr.mxu0 0.0
    %184 = vmatpush1.msra.mxu0 0.0
    %185 = vmatprep.subr.mxu0 0.0
    %186 = vmatpush1.msra.mxu0 0.0
    %187 = vmatprep.subr.mxu0 0.0
    %188 = vmatpush1.msra.mxu0 0.0
    %189 = vmatprep.subr.mxu0 0.0
    %190 = vmatpush1.msra.mxu0 0.0
    %191 = vmatprep.subr.mxu0 0.0
    %192 = vmatpush1.msra.mxu0 0.0
    %193 = vmatprep.subr.mxu0 0.0
    %194 = vmatpush1.msra.mxu0 0.0
    %195 = vmatprep.subr.mxu0 0.0
    %196 = vmatpush1.msra.mxu0 0.0
    %197 = vmatprep.subr.mxu0 0.0
    %198 = vmatpush1.msra.mxu0 0.0
    %199 = vmatprep.subr.mxu0 0.0
    %200 = vmatpush1.msra.mxu0 0.0
    %201 = vmatprep.subr.mxu0 0.0
    %202 = vmatpush1.msra.mxu0 0.0
    %203 = vmatprep.subr.mxu0 0.0
    %204 = vmatpush1.msra.mxu0 0.0
    %205 = vmatprep.subr.mxu0 0.0
    %206 = vmatpush1.msra.mxu0 0.0
    %207 = vmatprep.subr.mxu0 0.0
    %208 = vmatpush1.msra.mxu0 0.0
    %209 = vmatprep.subr.mxu0 0.0
    %210 = vmatpush1.msra.mxu0 0.0
    %211 = vmatprep.mubr.f32.mxu0 0.0
    %212 = vmatmul.mubr.f32.gmra.mrb[0].mxu0 %v123
    %v213 = vpop.f32.mrb[0].mxu0
    %v214 = vadd.f32 %v145, %v213
    %v215 = vpop.f32.mrb[0].mxu0
    %216 = vdwg.mxu0
    %v217 = vtanh.pop %v214
    %s218 = scalar_lea.vmem [#allocation2], 128
    %v219 = vld [vmem:[%s218] sm:$0xff]
    %v220 = vld [vmem:[%s218 + $0x8] sm:$0xff]
    %v221 = vld [vmem:[%s218 + $0x10] sm:$0xff]
    %v222 = vld [vmem:[%s218 + $0x18] sm:$0xff]
    %v223 = vld [vmem:[%s218 + $0x20] sm:$0xff]
    %v224 = vld [vmem:[%s218 + $0x28] sm:$0xff]
    %v225 = vld [vmem:[%s218 + $0x30] sm:$0xff]
    %v226 = vld [vmem:[%s218 + $0x38] sm:$0xff]
    %v227 = vld [vmem:[%s218 + $0x40] sm:$0xff]
    %v228 = vld [vmem:[%s218 + $0x48] sm:$0xff]
    %v229 = vld [vmem:[%s218 + $0x50] sm:$0xff]
    %v230 = vld [vmem:[%s218 + $0x58] sm:$0xff]
    %v231 = vld [vmem:[%s218 + $0x60] sm:$0xff]
    %v232 = vld [vmem:[%s218 + $0x68] sm:$0xff]
    %v233 = vld [vmem:[%s218 + $0x70] sm:$0xff]
    %v234 = vld [vmem:[%s218 + $0x78] sm:$0xff]
    %s235 = scalar_lea.vmem %s4, 1
    %v236 = vld [vmem:[%s235] sm:$0x1]
    %v238 = vlaneseq
    %v239 = vshrl.u32 %v238, 7
    %v240 = vsub.s32 0, %v239
    %v241 = vrot.slane %v236, %v240
    %243 = vmatprep.subr.mxu0 0.0
    %244 = vmatpush1.msra.mxu0 %v219
    %245 = vmatprep.subr.mxu0 0.0
    %246 = vmatpush1.msra.mxu0 %v220
    %247 = vmatprep.subr.mxu0 0.0
    %248 = vmatpush1.msra.mxu0 %v221
    %249 = vmatprep.subr.mxu0 0.0
    %250 = vmatpush1.msra.mxu0 %v222
    %251 = vmatprep.subr.mxu0 0.0
    %252 = vmatpush1.msra.mxu0 %v223
    %253 = vmatprep.subr.mxu0 0.0
    %254 = vmatpush1.msra.mxu0 %v224
    %255 = vmatprep.subr.mxu0 0.0
    %256 = vmatpush1.msra.mxu0 %v225
    %257 = vmatprep.subr.mxu0 0.0
    %258 = vmatpush1.msra.mxu0 %v226
    %259 = vmatprep.subr.mxu0 0.0
    %260 = vmatpush1.msra.mxu0 %v227
    %261 = vmatprep.subr.mxu0 0.0
    %262 = vmatpush1.msra.mxu0 %v228
    %263 = vmatprep.subr.mxu0 0.0
    %264 = vmatpush1.msra.mxu0 %v229
    %265 = vmatprep.subr.mxu0 0.0
    %266 = vmatpush1.msra.mxu0 %v230
    %267 = vmatprep.subr.mxu0 0.0
    %268 = vmatpush1.msra.mxu0 %v231
    %269 = vmatprep.subr.mxu0 0.0
    %270 = vmatpush1.msra.mxu0 %v232
    %271 = vmatprep.subr.mxu0 0.0
    %272 = vmatpush1.msra.mxu0 %v233
    %273 = vmatprep.subr.mxu0 0.0
    %274 = vmatpush1.msra.mxu0 %v234
    %275 = vmatprep.subr.mxu0 0.0
    %276 = vmatpush1.msra.mxu0 0.0
    %277 = vmatprep.subr.mxu0 0.0
    %278 = vmatpush1.msra.mxu0 0.0
    %279 = vmatprep.subr.mxu0 0.0
    %280 = vmatpush1.msra.mxu0 0.0
    %281 = vmatprep.subr.mxu0 0.0
    %282 = vmatpush1.msra.mxu0 0.0
    %283 = vmatprep.subr.mxu0 0.0
    %284 = vmatpush1.msra.mxu0 0.0
    %285 = vmatprep.subr.mxu0 0.0
    %286 = vmatpush1.msra.mxu0 0.0
    %287 = vmatprep.subr.mxu0 0.0
    %288 = vmatpush1.msra.mxu0 0.0
    %289 = vmatprep.subr.mxu0 0.0
    %290 = vmatpush1.msra.mxu0 0.0
    %291 = vmatprep.subr.mxu0 0.0
    %292 = vmatpush1.msra.mxu0 0.0
    %293 = vmatprep.subr.mxu0 0.0
    %294 = vmatpush1.msra.mxu0 0.0
    %295 = vmatprep.subr.mxu0 0.0
    %296 = vmatpush1.msra.mxu0 0.0
    %297 = vmatprep.subr.mxu0 0.0
    %298 = vmatpush1.msra.mxu0 0.0
    %299 = vmatprep.subr.mxu0 0.0
    %300 = vmatpush1.msra.mxu0 0.0
    %301 = vmatprep.subr.mxu0 0.0
    %302 = vmatpush1.msra.mxu0 0.0
    %303 = vmatprep.subr.mxu0 0.0
    %304 = vmatpush1.msra.mxu0 0.0
    %305 = vmatprep.subr.mxu0 0.0
    %306 = vmatpush1.msra.mxu0 0.0
    %307 = vmatprep.mubr.f32.mxu0 0.0
    %308 = vmatmul.mubr.f32.gmra.mrb[0].mxu0 %v217
    %v309 = vpop.f32.mrb[0].mxu0
    %v310 = vadd.f32 %v241, %v309
    %v311 = vpop.f32.mrb[0].mxu0
    %312 = vdwg.mxu0
    %v313 = vtanh.pop %v310
    %v314 = vld [vmem:[%s5] sm:$0xff]
    %v315 = vld [vmem:[%s5 + $0x8] sm:$0xff]
    %v316 = vld [vmem:[%s5 + $0x10] sm:$0xff]
    %v317 = vld [vmem:[%s5 + $0x18] sm:$0xff]
    %v318 = vld [vmem:[%s5 + $0x20] sm:$0xff]
    %v319 = vld [vmem:[%s5 + $0x28] sm:$0xff]
    %v320 = vld [vmem:[%s5 + $0x30] sm:$0xff]
    %v321 = vld [vmem:[%s5 + $0x38] sm:$0xff]
    %v322 = vld [vmem:[%s5 + $0x40] sm:$0xff]
    %v323 = vld [vmem:[%s5 + $0x48] sm:$0xff]
    %v324 = vld [vmem:[%s5 + $0x50] sm:$0xff]
    %v325 = vld [vmem:[%s5 + $0x58] sm:$0xff]
    %v326 = vld [vmem:[%s5 + $0x60] sm:$0xff]
    %v327 = vld [vmem:[%s5 + $0x68] sm:$0xff]
    %v328 = vld [vmem:[%s5 + $0x70] sm:$0xff]
    %v329 = vld [vmem:[%s5 + $0x78] sm:$0xff]
    %v330 = vld [vmem:[%s6] sm:$0x1]
    %v332 = vlaneseq
    %v333 = vshrl.u32 %v332, 7
    %v334 = vsub.s32 0, %v333
    %v335 = vrot.slane %v330, %v334
    %337 = vmatprep.subr.mxu0 0.0
    %338 = vmatpush1.msra.mxu0 %v314
    %339 = vmatprep.subr.mxu0 0.0
    %340 = vmatpush1.msra.mxu0 %v315
    %341 = vmatprep.subr.mxu0 0.0
    %342 = vmatpush1.msra.mxu0 %v316
    %343 = vmatprep.subr.mxu0 0.0
    %344 = vmatpush1.msra.mxu0 %v317
    %345 = vmatprep.subr.mxu0 0.0
    %346 = vmatpush1.msra.mxu0 %v318
    %347 = vmatprep.subr.mxu0 0.0
    %348 = vmatpush1.msra.mxu0 %v319
    %349 = vmatprep.subr.mxu0 0.0
    %350 = vmatpush1.msra.mxu0 %v320
    %351 = vmatprep.subr.mxu0 0.0
    %352 = vmatpush1.msra.mxu0 %v321
    %353 = vmatprep.subr.mxu0 0.0
    %354 = vmatpush1.msra.mxu0 %v322
    %355 = vmatprep.subr.mxu0 0.0
    %356 = vmatpush1.msra.mxu0 %v323
    %357 = vmatprep.subr.mxu0 0.0
    %358 = vmatpush1.msra.mxu0 %v324
    %359 = vmatprep.subr.mxu0 0.0
    %360 = vmatpush1.msra.mxu0 %v325
    %361 = vmatprep.subr.mxu0 0.0
    %362 = vmatpush1.msra.mxu0 %v326
    %363 = vmatprep.subr.mxu0 0.0
    %364 = vmatpush1.msra.mxu0 %v327
    %365 = vmatprep.subr.mxu0 0.0
    %366 = vmatpush1.msra.mxu0 %v328
    %367 = vmatprep.subr.mxu0 0.0
    %368 = vmatpush1.msra.mxu0 %v329
    %369 = vmatprep.subr.mxu0 0.0
    %370 = vmatpush1.msra.mxu0 0.0
    %371 = vmatprep.subr.mxu0 0.0
    %372 = vmatpush1.msra.mxu0 0.0
    %373 = vmatprep.subr.mxu0 0.0
    %374 = vmatpush1.msra.mxu0 0.0
    %375 = vmatprep.subr.mxu0 0.0
    %376 = vmatpush1.msra.mxu0 0.0
    %377 = vmatprep.subr.mxu0 0.0
    %378 = vmatpush1.msra.mxu0 0.0
    %379 = vmatprep.subr.mxu0 0.0
    %380 = vmatpush1.msra.mxu0 0.0
    %381 = vmatprep.subr.mxu0 0.0
    %382 = vmatpush1.msra.mxu0 0.0
    %383 = vmatprep.subr.mxu0 0.0
    %384 = vmatpush1.msra.mxu0 0.0
    %385 = vmatprep.subr.mxu0 0.0
    %386 = vmatpush1.msra.mxu0 0.0
    %387 = vmatprep.subr.mxu0 0.0
    %388 = vmatpush1.msra.mxu0 0.0
    %389 = vmatprep.subr.mxu0 0.0
    %390 = vmatpush1.msra.mxu0 0.0
    %391 = vmatprep.subr.mxu0 0.0
    %392 = vmatpush1.msra.mxu0 0.0
    %393 = vmatprep.subr.mxu0 0.0
    %394 = vmatpush1.msra.mxu0 0.0
    %395 = vmatprep.subr.mxu0 0.0
    %396 = vmatpush1.msra.mxu0 0.0
    %397 = vmatprep.subr.mxu0 0.0
    %398 = vmatpush1.msra.mxu0 0.0
    %399 = vmatprep.subr.mxu0 0.0
    %400 = vmatpush1.msra.mxu0 0.0
    %401 = vmatprep.mubr.f32.mxu0 0.0
    %402 = vmatmul.mubr.f32.gmra.mrb[0].mxu0 %v313
    %v403 = vpop.f32.mrb[0].mxu0
    %v404 = vadd.f32 %v335, %v403
    %v405 = vpop.f32.mrb[0].mxu0
    %406 = vdwg.mxu0
    %407 = vst.msk [vmem:[%s7] sm:$0xff] %vm49, %v404
    // Predicated region
    $region34: #{_net_forward_impl.1} parent=1 // pred_check
      _
    $region35: #{_net_forward_impl.1} parent=1 // pred_check_branch
      %409 = sbr.rel (0) target = $region37
    $region36: #{_net_forward_impl.1} parent=1 // pred_region
      _
    $region37: #{_net_forward_impl.1} parent=1 // pred_fallthru
      _
    // Predicated region
    $region38: #{_net_forward_impl.1} parent=1 // pred_check
      _
    $region39: #{_net_forward_impl.1} parent=1 // pred_check_branch
      %411 = sbr.rel (0) target = $region41
    $region40: #{_net_forward_impl.1} parent=1 // pred_region
      _
    $region41: #{_net_forward_impl.1} parent=1 // pred_fallthru
      _
    %412 = vsyncpa [#allocation3], 1

</llo_original>
